<compile_context>
chip_gen: v7x
topology: tpu7x:2x2x1
jax: 0.10.0
libtpu: 0.0.40
codegen_flags: <defaults>
</compile_context>

<pallas_src>
import functools

import jax
import jax.numpy as jnp
import numpy as np
from jax.experimental import pallas as pl
from jax.experimental.pallas import tpu as pltpu

_LANES = 128
_SUBLANES = 8
_MAX_TILE_ROWS = 2048  # 2048 x 128 f32 = 1 MiB per input block per grid step.


def _round_up(x, m):
    return ((x + m - 1) // m) * m


def _segmented_sums_kernel(sid_ref, t_ref, p_ref, out_ref, *, criterion, delta,
                           both_signs, k_pad):
    """One grid step: masked error stats for one (tile_rows, 128) row tile.

    Per-segment partial sums are formed with a one-hot(segment id) matmul on
    the MXU and written to this step's (1, k_pad, 128) output block, packed in
    lanes 0..n_stats-1:
        both_signs=False: [crit, abs, cnt]                  (mae: [abs, cnt])
        both_signs=True : [crit-, crit+, abs-, abs+, cnt]   (mae: [abs-, abs+, cnt])
    where "-"/"+" are the sign hypotheses (error = t + p / t - p).
    """
    sid = sid_ref[...]                       # (1, tile_rows) int32, -1 = padding
    t = t_ref[...]                           # (tile_rows, 128) f32
    p = p_ref[...]
    tile_rows = t.shape[0]

    # One-hot segment membership (padding rows with sid == -1 match nothing).
    k_iota = jax.lax.broadcasted_iota(jnp.int32, (k_pad, tile_rows), 0)
    onehot = (sid == k_iota).astype(jnp.float32)          # (k_pad, tile_rows)

    mask = jnp.logical_not(jnp.isnan(t))
    cnt = mask.astype(jnp.float32)

    def _crit(d, ad):
        if criterion == "mse":
            return d * d
        # huber
        return jnp.where(ad <= delta, 0.5 * d * d, delta * (ad - 0.5 * delta))

    # Single select: diff is already 0 where the label is missing (NaN target).
    d_pos = jnp.where(mask, t - p, 0.0)
    a_pos = jnp.abs(d_pos)

    stats = []
    if both_signs:
        d_neg = jnp.where(mask, t + p, 0.0)   # hypothesis: pred sign = -1
        a_neg = jnp.abs(d_neg)
        if criterion != "mae":
            stats += [_crit(d_neg, a_neg), _crit(d_pos, a_pos)]
        stats += [a_neg, a_pos]
    else:
        if criterion != "mae":
            stats.append(_crit(d_pos, a_pos))
        stats.append(a_pos)
    stats.append(cnt)

    lane = jax.lax.broadcasted_iota(jnp.int32, (k_pad, _LANES), 1)
    packed = jnp.zeros((k_pad, _LANES), jnp.float32)
    for i, s in enumerate(stats):
        # (k_pad, tile_rows) @ (tile_rows, 128) -> (k_pad, 128) on the MXU.
        part = jnp.dot(onehot, s, preferred_element_type=jnp.float32)
        col = jnp.sum(part, axis=1, keepdims=True)          # (k_pad, 1)
        packed = jnp.where(lane == i, col, packed)
    out_ref[0] = packed


def fused_masked_error_sums(pairs, *, criterion, delta, both_signs=False):
    """Masked (non-NaN target) error sums for a list of (target, pred) tensors.

    All segments are laid out contiguously in one ragged (rows, 128) slab and
    reduced per segment in a single Pallas launch with a flat "parallel" grid.

    Returns (num_segments,) f32 arrays:
      both_signs=False: (crit_sum, abs_sum, valid_count)
      both_signs=True : (crit_sum_neg, crit_sum_pos, abs_sum_neg, abs_sum_pos,
                         valid_count)
    """
    num_seg = len(pairs)
    k_pad = _round_up(max(num_seg, 1), _SUBLANES)

    flat = [(jnp.ravel(jnp.asarray(t, jnp.float32)),
             jnp.ravel(jnp.asarray(p, jnp.float32))) for t, p in pairs]
    seg_rows = [max(1, pl.cdiv(int(t.shape[0]), _LANES)) for t, _ in flat]
    total_rows = sum(seg_rows)

    if total_rows <= _MAX_TILE_ROWS:
        tile_rows = _round_up(total_rows, _SUBLANES)
        num_tiles = 1
    else:
        tile_rows = _MAX_TILE_ROWS
        num_tiles = pl.cdiv(total_rows, tile_rows)
    rows_pad = tile_rows * num_tiles

    # Ragged slab: each segment padded only to whole 128-lane rows.
    t_parts, p_parts, sid_parts = [], [], []
    for k, ((t, p), nr) in enumerate(zip(flat, seg_rows)):
        pad_n = nr * _LANES - t.shape[0]
        if pad_n:
            t = jnp.pad(t, (0, pad_n), constant_values=np.nan)
            p = jnp.pad(p, (0, pad_n))
        t_parts.append(t)
        p_parts.append(p)
        sid_parts.append(jnp.full((nr,), k, jnp.int32))
    extra_rows = rows_pad - total_rows
    if extra_rows:
        t_parts.append(jnp.full((extra_rows * _LANES,), np.nan, jnp.float32))
        p_parts.append(jnp.zeros((extra_rows * _LANES,), jnp.float32))
        sid_parts.append(jnp.full((extra_rows,), -1, jnp.int32))

    t_slab = jnp.concatenate(t_parts).reshape(rows_pad, _LANES)
    p_slab = jnp.concatenate(p_parts).reshape(rows_pad, _LANES)
    sid = jnp.concatenate(sid_parts).reshape(num_tiles, tile_rows)

    if both_signs:
        n_stats = 3 if criterion == "mae" else 5
    else:
        n_stats = 2 if criterion == "mae" else 3

    tile_bytes = tile_rows * _LANES * 4
    vmem_budget = (4 * tile_bytes                  # t / p, double-buffered
                   + (n_stats + 6) * tile_bytes    # element-wise temporaries
                   + 2 * k_pad * tile_rows * 4     # one-hot
                   + 4 * k_pad * _LANES * 4        # output blocks
                   + (2 << 20))
    vmem_limit = int(min(48 << 20, max(16 << 20, vmem_budget)))

    kernel = functools.partial(_segmented_sums_kernel, criterion=criterion,
                               delta=float(delta), both_signs=both_signs,
                               k_pad=k_pad)
    out = pl.pallas_call(
        kernel,
        out_shape=jax.ShapeDtypeStruct((num_tiles, k_pad, _LANES), jnp.float32),
        grid_spec=pltpu.PrefetchScalarGridSpec(
            num_scalar_prefetch=0,
            grid=(num_tiles,),
            in_specs=[
                pl.BlockSpec((1, tile_rows), lambda i: (i, 0)),
                pl.BlockSpec((tile_rows, _LANES), lambda i: (i, 0)),
                pl.BlockSpec((tile_rows, _LANES), lambda i: (i, 0)),
            ],
            out_specs=pl.BlockSpec((1, k_pad, _LANES), lambda i: (i, 0, 0)),
        ),
        compiler_params=pltpu.CompilerParams(
            dimension_semantics=("parallel",),
            vmem_limit_bytes=vmem_limit),
    )(sid, t_slab, p_slab)

    # Tiny cross-tile reduction (num_tiles x k_pad x 128 f32) in plain JAX.
    sums = jnp.sum(out, axis=0)[:num_seg]
    # TODO(synk): counts/sums accumulate in f32; >~16.7M valid elements per
    # segment would lose integer precision on the count.
    if both_signs:
        if criterion == "mae":
            ab_neg, ab_pos, cnt = sums[:, 0], sums[:, 1], sums[:, 2]
            return ab_neg, ab_pos, ab_neg, ab_pos, cnt
        return sums[:, 0], sums[:, 1], sums[:, 2], sums[:, 3], sums[:, 4]
    if criterion == "mae":
        ab, cnt = sums[:, 0], sums[:, 1]
        return ab, ab, cnt
    return sums[:, 0], sums[:, 1], sums[:, 2]


class MinCombinedLoss:
    """JAX/Pallas port of chgnet MinCombinedLoss forward semantics."""

    def __init__(
        self,
        *,
        target_str: str = "ef",
        criterion: str = "MSE",
        energy_loss_ratio: float = 1,
        force_loss_ratio: float = 1,
        stress_loss_ratio: float = 0.1,
        mag_loss_ratio: float = 0.1,
        delta: float = 0.1,
        allow_missing_labels: bool = True,
    ) -> None:
        if criterion in {"MSE", "mse"}:
            self.criterion_name = "mse"
        elif criterion in {"MAE", "mae", "l1"}:
            self.criterion_name = "mae"
        elif criterion == "Huber":
            self.criterion_name = "huber"
        else:
            raise NotImplementedError
        self.delta = delta
        self.target_str = target_str
        self.energy_loss_ratio = energy_loss_ratio
        self.force_loss_ratio = force_loss_ratio if "f" in target_str else 0
        self.stress_loss_ratio = stress_loss_ratio if "s" in target_str else 0
        self.mag_loss_ratio = mag_loss_ratio if "m" in target_str else 0
        self.allow_missing_labels = allow_missing_labels
        # TODO(synk): allow_missing_labels=False with NaN-containing targets would
        # produce a NaN loss in PyTorch; this kernel always masks NaN targets.

    def __call__(self, targets, prediction):
        out = {"loss": jnp.float32(0.0)}
        ratios = {"e": self.energy_loss_ratio,
                  "f": self.force_loss_ratio,
                  "s": self.stress_loss_ratio}

        # ---- e / f / s : one fused launch --------------------------------
        efs_keys, efs_pairs = [], []
        if "e" in self.target_str:
            efs_keys.append("e")
            efs_pairs.append(
                (jnp.ravel(jnp.asarray(targets["e"], jnp.float32)),
                 jnp.ravel(jnp.asarray(prediction["e"], jnp.float32))))
        for key in ("f", "s"):
            if key in self.target_str:
                t_cat = jnp.concatenate(
                    [jnp.ravel(jnp.asarray(x, jnp.float32)) for x in targets[key]])
                p_cat = jnp.concatenate(
                    [jnp.ravel(jnp.asarray(x, jnp.float32)) for x in prediction[key]])
                efs_keys.append(key)
                efs_pairs.append((t_cat, p_cat))

        if efs_pairs:
            crit, ab, cnt = fused_masked_error_sums(
                efs_pairs, criterion=self.criterion_name, delta=self.delta)
            for i, key in enumerate(efs_keys):
                cnt_safe = jnp.maximum(cnt[i], 1.0)  # all-NaN guard -> 0 instead of NaN
                out["loss"] = out["loss"] + ratios[key] * (crit[i] / cnt_safe)
                out[f"{key}_MAE"] = ab[i] / cnt_safe
                if key == "e":
                    e_arr = jnp.asarray(prediction["e"])
                    out["e_MAE_size"] = int(e_arr.shape[0]) if e_arr.ndim else 1
                else:
                    # Valid (non-NaN) element count, kept on device (no host sync).
                    out[f"{key}_MAE_size"] = cnt[i].astype(jnp.int32)

        # ---- magmoms: one fused launch, both sign hypotheses per read -----
        if "m" in self.target_str:
            m_pairs, sizes = [], []
            for mag_pred, mag_target in zip(prediction["m"], targets["m"]):
                if mag_target is None:
                    # TODO(synk): PyTorch with allow_missing_labels=False would
                    # crash on None targets; we always skip them.
                    continue
                m_pairs.append(
                    (jnp.ravel(jnp.asarray(mag_target, jnp.float32)),
                     jnp.ravel(jnp.asarray(mag_pred, jnp.float32))))
                sizes.append(int(m_pairs[-1][0].shape[0]))

            if m_pairs:
                crit_neg, crit_pos, ab_neg, ab_pos, cnt = fused_masked_error_sums(
                    m_pairs, criterion=self.criterion_name, delta=self.delta,
                    both_signs=True)
                sizes_arr = jnp.asarray(sizes, jnp.float32)
                if self.allow_missing_labels:
                    # Structure kept only if it has no NaN target (device-side,
                    # no per-structure host sync).
                    valid = cnt >= (sizes_arr - 0.5)
                else:
                    valid = jnp.ones_like(cnt, dtype=bool)
                # np.argmin([crit(-p,t), crit(p,t)]) with ties -> index 0 -> sign -1.
                neg_better = crit_neg <= crit_pos
                chosen_crit = jnp.where(neg_better, crit_neg, crit_pos)
                chosen_ab = jnp.where(neg_better, ab_neg, ab_pos)
                w = valid.astype(jnp.float32)
                crit_sum = jnp.sum(chosen_crit * w)
                ab_sum = jnp.sum(chosen_ab * w)
                cnt_sum = jnp.sum(cnt * w)
                cnt_sum_safe = jnp.maximum(cnt_sum, 1.0)
                out["loss"] = out["loss"] + self.mag_loss_ratio * (crit_sum / cnt_sum_safe)
                out["m_MAE"] = ab_sum / cnt_sum_safe
                out["m_MAE_size"] = jnp.sum(sizes_arr * w).astype(jnp.int32)
            else:
                # Matches PyTorch's (inconsistent) empty-case types.
                out["m_MAE"] = jnp.zeros([1])
                out["m_MAE_size"] = 0

        return out


# ----------------------------- self-test ---------------------------------
def _masked_stats(t, p):
    t = jnp.ravel(t)
    p = jnp.ravel(p)
    m = ~jnp.isnan(t)
    d = jnp.where(m, t - p, 0.0)
    cnt = jnp.sum(m)
    return jnp.sum(d * d) / cnt, jnp.sum(jnp.abs(d)) / cnt, cnt


def _huber_mean(t, p, delta):
    t = jnp.ravel(t)
    p = jnp.ravel(p)
    m = ~jnp.isnan(t)
    d = jnp.where(m, t - p, 0.0)
    ad = jnp.abs(d)
    h = jnp.where(ad <= delta, 0.5 * d * d, delta * (ad - 0.5 * delta))
    return jnp.sum(h) / jnp.sum(m)


if __name__ == "__main__":
    key = jax.random.PRNGKey(0)
    keys = jax.random.split(key, 16)

    batch = 4
    n_atoms_a, n_atoms_b, n_atoms_d = 6, 10, 5

    e_target = jax.random.normal(keys[0], (batch,), dtype=jnp.float32)
    e_target = e_target.at[1].set(jnp.nan)            # missing energy label
    e_pred = jax.random.normal(keys[1], (batch,), dtype=jnp.float32)

    f_target_a = jax.random.normal(keys[2], (n_atoms_a, 3), dtype=jnp.float32)
    f_target_b = jax.random.normal(keys[3], (n_atoms_b, 3), dtype=jnp.float32)
    f_target_b = f_target_b.at[2, 1].set(jnp.nan)     # missing force label
    f_pred_a = jax.random.normal(keys[4], (n_atoms_a, 3), dtype=jnp.float32)
    f_pred_b = jax.random.normal(keys[5], (n_atoms_b, 3), dtype=jnp.float32)

    s_target_a = jax.random.normal(keys[12], (3, 3), dtype=jnp.float32)
    s_target_b = jax.random.normal(keys[13], (3, 3), dtype=jnp.float32)
    s_target_b = s_target_b.at[0, 0].set(jnp.nan)     # missing stress label
    s_pred_a = jax.random.normal(keys[14], (3, 3), dtype=jnp.float32)
    s_pred_b = jax.random.normal(keys[15], (3, 3), dtype=jnp.float32)

    # magmoms: A valid, B has NaN (skipped), C is None (skipped), D valid
    m_target_a = jax.random.normal(keys[6], (n_atoms_a,), dtype=jnp.float32)
    m_pred_a = jax.random.normal(keys[7], (n_atoms_a,), dtype=jnp.float32)
    m_target_b = jax.random.normal(keys[8], (n_atoms_b,), dtype=jnp.float32)
    m_target_b = m_target_b.at[3].set(jnp.nan)
    m_pred_b = jax.random.normal(keys[9], (n_atoms_b,), dtype=jnp.float32)
    m_pred_d = jax.random.normal(keys[10], (n_atoms_d,), dtype=jnp.float32)
    m_target_d = -m_pred_d + 0.01 * jax.random.normal(keys[11], (n_atoms_d,),
                                                      dtype=jnp.float32)
    m_pred_c = jnp.ones((3,), dtype=jnp.float32)

    targets_ef = {"e": e_target, "f": [f_target_a, f_target_b]}
    prediction_ef = {"e": e_pred, "f": [f_pred_a, f_pred_b]}

    f_t = jnp.concatenate([f_target_a.ravel(), f_target_b.ravel()])
    f_p = jnp.concatenate([f_pred_a.ravel(), f_pred_b.ravel()])
    s_t = jnp.concatenate([s_target_a.ravel(), s_target_b.ravel()])
    s_p = jnp.concatenate([s_pred_a.ravel(), s_pred_b.ravel()])
    e_mse, e_mae, _ = _masked_stats(e_target, e_pred)
    f_mse, f_mae, f_cnt = _masked_stats(f_t, f_p)
    s_mse, s_mae, s_cnt = _masked_stats(s_t, s_p)

    # --- test 1: target_str='ef', MSE ---
    loss_fn = MinCombinedLoss(target_str="ef", criterion="MSE")
    out = loss_fn(targets_ef, prediction_ef)
    jax.block_until_ready(out["loss"])
    np.testing.assert_allclose(np.asarray(out["loss"]), np.asarray(e_mse + f_mse),
                               rtol=1e-5)
    np.testing.assert_allclose(np.asarray(out["e_MAE"]), np.asarray(e_mae), rtol=1e-5)
    np.testing.assert_allclose(np.asarray(out["f_MAE"]), np.asarray(f_mae), rtol=1e-5)
    assert int(out["f_MAE_size"]) == int(f_cnt)
    assert out["e_MAE_size"] == batch

    # --- test 2: target_str='ef', Huber ---
    loss_fn_h = MinCombinedLoss(target_str="ef", criterion="Huber", delta=0.1)
    out_h = loss_fn_h(targets_ef, prediction_ef)
    jax.block_until_ready(out_h["loss"])
    ref_h = _huber_mean(e_target, e_pred, 0.1) + _huber_mean(f_t, f_p, 0.1)
    np.testing.assert_allclose(np.asarray(out_h["loss"]), np.asarray(ref_h),
                               rtol=1e-5, atol=1e-7)

    # --- test 3: target_str='efm', MSE (magmom sign selection + skipping) ---
    targets_efm = {"e": e_target, "f": [f_target_a, f_target_b],
                   "m": [m_target_a, m_target_b, None, m_target_d]}
    prediction_efm = {"e": e_pred, "f": [f_pred_a, f_pred_b],
                      "m": [m_pred_a, m_pred_b, m_pred_c, m_pred_d]}
    loss_fn_m = MinCombinedLoss(target_str="efm", criterion="MSE")
    out_m = loss_fn_m(targets_efm, prediction_efm)
    jax.block_until_ready(out_m["loss"])

    def _sign_for(t, p):
        crit_neg = jnp.mean((t + p) ** 2)   # criterion(-pred, target)
        crit_pos = jnp.mean((t - p) ** 2)   # criterion(+pred, target)
        return jnp.where(crit_neg <= crit_pos, -1.0, 1.0)

    s_a = _sign_for(m_target_a, m_pred_a)
    s_d = _sign_for(m_target_d, m_pred_d)
    mt = jnp.concatenate([m_target_a, m_target_d])
    mp = jnp.concatenate([m_pred_a * s_a, m_pred_d * s_d])
    m_mse_ref = jnp.mean((mt - mp) ** 2)
    m_mae_ref = jnp.mean(jnp.abs(mt - mp))
    ref_loss_m = e_mse + f_mse + 0.1 * m_mse_ref
    np.testing.assert_allclose(np.asarray(out_m["loss"]), np.asarray(ref_loss_m),
                               rtol=1e-5)
    np.testing.assert_allclose(np.asarray(out_m["m_MAE"]), np.asarray(m_mae_ref),
                               rtol=1e-5)
    assert int(out_m["m_MAE_size"]) == n_atoms_a + n_atoms_d

    # --- test 4: target_str='efs', MAE (exercises 2-stat path + stress) ---
    targets_efs = {"e": e_target, "f": [f_target_a, f_target_b],
                   "s": [s_target_a, s_target_b]}
    prediction_efs = {"e": e_pred, "f": [f_pred_a, f_pred_b],
                      "s": [s_pred_a, s_pred_b]}
    loss_fn_s = MinCombinedLoss(target_str="efs", criterion="MAE")
    out_s = loss_fn_s(targets_efs, prediction_efs)
    jax.block_until_ready(out_s["loss"])
    ref_loss_s = e_mae + f_mae + 0.1 * s_mae
    np.testing.assert_allclose(np.asarray(out_s["loss"]), np.asarray(ref_loss_s),
                               rtol=1e-5)
    np.testing.assert_allclose(np.asarray(out_s["s_MAE"]), np.asarray(s_mae),
                               rtol=1e-5)
    assert int(out_s["s_MAE_size"]) == int(s_cnt)

    print("KERNEL_OK")
</pallas_src>

<mosaic_0001>
module attributes {stable_mosaic.version = 11 : i64} {
  func.func @_segmented_sums_kernel(%arg0: i32, %arg1: memref<1x8xi32, #tpu.memory_space<vmem>>, %arg2: memref<8x128xf32, #tpu.memory_space<vmem>>, %arg3: memref<8x128xf32, #tpu.memory_space<vmem>>, %arg4: memref<1x8x128xf32, #tpu.memory_space<vmem>>) attributes {dimension_semantics = [#tpu.dimension_semantics<parallel>], iteration_bounds = array<i64: 1>, scalar_prefetch = 0 : i64, scratch_operands = 0 : i64, tpu.core_type = #tpu.core_type<tc>, window_params = [{transform_indices = @transform_0, window_bounds = array<i64: 1, 8>}, {transform_indices = @transform_1, window_bounds = array<i64: 8, 128>}, {transform_indices = @transform_2, window_bounds = array<i64: 8, 128>}, {transform_indices = @transform_3, window_bounds = array<i64: 1, 8, 128>}]} {
    %c0 = arith.constant 0 : index
    %c0_0 = arith.constant 0 : index
    %0 = vector.load %arg1[%c0, %c0_0] : memref<1x8xi32, #tpu.memory_space<vmem>>, vector<1x8xi32>
    %c0_1 = arith.constant 0 : index
    %c0_2 = arith.constant 0 : index
    %1 = vector.load %arg2[%c0_1, %c0_2] : memref<8x128xf32, #tpu.memory_space<vmem>>, vector<8x128xf32>
    %c0_3 = arith.constant 0 : index
    %c0_4 = arith.constant 0 : index
    %2 = vector.load %arg3[%c0_3, %c0_4] : memref<8x128xf32, #tpu.memory_space<vmem>>, vector<8x128xf32>
    %3 = tpu.iota {dimensions = array<i32: 0>} : vector<8x8xi32>
    %4 = vector.broadcast %0 : vector<1x8xi32> to vector<8x8xi32>
    %5 = arith.cmpi eq, %4, %3 : vector<8x8xi32>
    %6 = arith.extui %5 : vector<8x8xi1> to vector<8x8xi32>
    %7 = arith.sitofp %6 : vector<8x8xi32> to vector<8x8xf32>
    %8 = arith.cmpf one, %1, %1 : vector<8x128xf32>
    %cst = arith.constant dense<true> : vector<8x128xi1>
    %9 = arith.xori %8, %cst : vector<8x128xi1>
    %10 = arith.extui %9 : vector<8x128xi1> to vector<8x128xi32>
    %11 = arith.sitofp %10 : vector<8x128xi32> to vector<8x128xf32>
    %12 = arith.subf %1, %2 : vector<8x128xf32>
    %cst_5 = arith.constant 0.000000e+00 : f32
    %13 = vector.broadcast %cst_5 : f32 to vector<8x128xf32>
    %14 = arith.select %9, %12, %13 : vector<8x128xi1>, vector<8x128xf32>
    %15 = math.absf %14 : vector<8x128xf32>
    %16 = arith.mulf %14, %14 : vector<8x128xf32>
    %17 = tpu.iota {dimensions = array<i32: 1>} : vector<8x128xi32>
    %cst_6 = arith.constant 0.000000e+00 : f32
    %18 = vector.broadcast %cst_6 : f32 to vector<8x128xf32>
    %cst_7 = arith.constant dense<0.000000e+00> : vector<8x128xf32>
    %19 = tpu.matmul %7, %16, %cst_7 {dimension_numbers = #tpu.dot_dimension_numbers<[1], [0], [0], [1], [0, 0, 1, 1], [], []>} : vector<8x8xf32>, vector<8x128xf32>, vector<8x128xf32> -> vector<8x128xf32>
    %cst_8 = arith.constant dense<0.000000e+00> : vector<8xf32>
    %20 = vector.multi_reduction <add>, %19, %cst_8 [1] : vector<8x128xf32> to vector<8xf32>
    %21 = vector.shape_cast %20 : vector<8xf32> to vector<8x1xf32>
    %c0_i32 = arith.constant 0 : i32
    %22 = vector.broadcast %c0_i32 : i32 to vector<8x128xi32>
    %23 = arith.cmpi eq, %17, %22 : vector<8x128xi32>
    %24 = vector.shape_cast %21 : vector<8x1xf32> to vector<8x1xf32>
    %25 = vector.broadcast %24 : vector<8x1xf32> to vector<8x128xf32>
    %26 = arith.select %23, %25, %18 : vector<8x128xi1>, vector<8x128xf32>
    %cst_9 = arith.constant dense<0.000000e+00> : vector<8x128xf32>
    %27 = tpu.matmul %7, %15, %cst_9 {dimension_numbers = #tpu.dot_dimension_numbers<[1], [0], [0], [1], [0, 0, 1, 1], [], []>} : vector<8x8xf32>, vector<8x128xf32>, vector<8x128xf32> -> vector<8x128xf32>
    %cst_10 = arith.constant dense<0.000000e+00> : vector<8xf32>
    %28 = vector.multi_reduction <add>, %27, %cst_10 [1] : vector<8x128xf32> to vector<8xf32>
    %29 = vector.shape_cast %28 : vector<8xf32> to vector<8x1xf32>
    %c1_i32 = arith.constant 1 : i32
    %30 = vector.broadcast %c1_i32 : i32 to vector<8x128xi32>
    %31 = arith.cmpi eq, %17, %30 : vector<8x128xi32>
    %32 = vector.shape_cast %29 : vector<8x1xf32> to vector<8x1xf32>
    %33 = vector.broadcast %32 : vector<8x1xf32> to vector<8x128xf32>
    %34 = arith.select %31, %33, %26 : vector<8x128xi1>, vector<8x128xf32>
    %cst_11 = arith.constant dense<0.000000e+00> : vector<8x128xf32>
    %35 = tpu.matmul %7, %11, %cst_11 {dimension_numbers = #tpu.dot_dimension_numbers<[1], [0], [0], [1], [0, 0, 1, 1], [], []>} : vector<8x8xf32>, vector<8x128xf32>, vector<8x128xf32> -> vector<8x128xf32>
    %cst_12 = arith.constant dense<0.000000e+00> : vector<8xf32>
    %36 = vector.multi_reduction <add>, %35, %cst_12 [1] : vector<8x128xf32> to vector<8xf32>
    %37 = vector.shape_cast %36 : vector<8xf32> to vector<8x1xf32>
    %c2_i32 = arith.constant 2 : i32
    %38 = vector.broadcast %c2_i32 : i32 to vector<8x128xi32>
    %39 = arith.cmpi eq, %17, %38 : vector<8x128xi32>
    %40 = vector.shape_cast %37 : vector<8x1xf32> to vector<8x1xf32>
    %41 = vector.broadcast %40 : vector<8x1xf32> to vector<8x128xf32>
    %42 = arith.select %39, %41, %34 : vector<8x128xi1>, vector<8x128xf32>
    %c0_13 = arith.constant 0 : index
    %c0_14 = arith.constant 0 : index
    %c0_15 = arith.constant 0 : index
    %43 = vector.load %arg4[%c0_13, %c0_14, %c0_15] : memref<1x8x128xf32, #tpu.memory_space<vmem>>, vector<1x8x128xf32>
    %44 = vector.shape_cast %43 : vector<1x8x128xf32> to vector<8x128xf32>
    %45 = vector.shape_cast %42 : vector<8x128xf32> to vector<1x8x128xf32>
    tpu.vector_store %arg4[%c0_13, %c0_14, %c0_15], %45 {strides = array<i32>} : memref<1x8x128xf32, #tpu.memory_space<vmem>>, vector<1x8x128xf32>,
    return
  }
  func.func @transform_0(%arg0: i32) -> (i32, i32) {
    %c0_i32 = arith.constant 0 : i32
    %c0_i32_0 = arith.constant 0 : i32
    return %arg0, %c0_i32 : i32, i32
  }
  func.func @transform_1(%arg0: i32) -> (i32, i32) {
    %c0_i32 = arith.constant 0 : i32
    %c0_i32_0 = arith.constant 0 : i32
    return %arg0, %c0_i32 : i32, i32
  }
  func.func @transform_2(%arg0: i32) -> (i32, i32) {
    %c0_i32 = arith.constant 0 : i32
    %c0_i32_0 = arith.constant 0 : i32
    return %arg0, %c0_i32 : i32, i32
  }
  func.func @transform_3(%arg0: i32) -> (i32, i32, i32) {
    %c0_i32 = arith.constant 0 : i32
    %c0_i32_0 = arith.constant 0 : i32
    %c0_i32_1 = arith.constant 0 : i32
    return %arg0, %c0_i32, %c0_i32_0 : i32, i32, i32
  }
}

</mosaic_0001>

<llo_original>
// kernel: tpu_custom_call.1
$region0: #{tpu_custom_call.1}
  #allocation0 [shape = 'u32[]', space=smem, size = 0x4, offset = 0x4, fixed_abs, tag = 'smem constant byte address 0x4 - core index']
  #allocation1 [shape = 'u32[144,128]{1,0:T(1,128)}', space=vmem, size = 0x12000, scoped, tag = 'internal scratch']
  %s0 = inlined_call_operand.hbm [shape: s32[1,8], index: 0, kind: input, shape index: {}]
  %s1 = inlined_call_operand.hbm [shape: f32[8,128], index: 1, kind: input, shape index: {}]
  %s2 = inlined_call_operand.hbm [shape: f32[8,128], index: 2, kind: input, shape index: {}]
  %s3 = inlined_call_operand.hbm [shape: f32[1,8,128], index: 3, kind: output, shape index: {}]
  %s4 = sld [smem:[#allocation0]]
  $region34: #{tpu_custom_call.1} parent=0
    _
  %s6 = ssub.s32 1, %s4
  %s7 = scalar_select 0, %s6, %s4
  $region1: #{tpu_custom_call.1} parent=0
    #allocation2 [shape = 'u8[512]{0}', space=vmem, size = 0x400, scoped, tag = 'input window, operand 0, single buffered']
    #allocation3 [shape = 's32[1]{0}', space=sflag, size = 0x4, scoped, tag = 'scoped memory for tpu_custom_call.1']
    #allocation4 [shape = 's32[1]{0}', space=sflag, size = 0x4, scoped, tag = 'scoped memory for tpu_custom_call.1']
    #allocation5 [shape = 'u8[4096]{0}', space=vmem, size = 0x1000, scoped, tag = 'input window, operand 1, single buffered']
    #allocation6 [shape = 's32[1]{0}', space=sflag, size = 0x4, scoped, tag = 'scoped memory for tpu_custom_call.1']
    #allocation7 [shape = 'u8[4096]{0}', space=vmem, size = 0x1000, scoped, tag = 'input window, operand 2, single buffered']
    #allocation8 [shape = 'u8[4096]{0}', space=vmem, size = 0x1000, scoped, tag = 'output window, operand 0, single buffered']
    %8 = vsyncpa [#allocation3], 0
    %9 = vsyncpa [#allocation6], 0
    %10 = vsyncpa [#allocation4], 0
    // Predicated region
    $region2: #{tpu_custom_call.1} parent=1 // pred_check
      _
    $region3: #{tpu_custom_call.1} parent=1 // pred_check_branch
      %12 = sbr.rel (0) target = $region5
    $region4: #{tpu_custom_call.1} parent=1 // pred_region
      %s14 = ssub.s32 16, 16
      %15 = vsyncadd [#allocation3], %s14
      %s17 = sshll.u32 [#allocation2], 4
      %s18 = int_to_ptr.vmem [resolvable:$true] %s17
      %20 = dma.hbm_to_vmem [thread:$0]  %s0, 16, %s18, [#allocation3]
    $region5: #{tpu_custom_call.1} parent=1 // pred_fallthru
      _
    // Predicated region
    $region6: #{tpu_custom_call.1} parent=1 // pred_check
      _
    $region7: #{tpu_custom_call.1} parent=1 // pred_check_branch
      %22 = sbr.rel (0) target = $region9
    $region8: #{tpu_custom_call.1} parent=1 // pred_region
      %s24 = ssub.s32 128, 128
      %25 = vsyncadd [#allocation6], %s24
      %s27 = sshll.u32 [#allocation5], 4
      %s28 = int_to_ptr.vmem [resolvable:$true] %s27
      %30 = dma.hbm_to_vmem [thread:$0]  %s1, 128, %s28, [#allocation6]
    $region9: #{tpu_custom_call.1} parent=1 // pred_fallthru
      _
    // Predicated region
    $region10: #{tpu_custom_call.1} parent=1 // pred_check
      _
    $region11: #{tpu_custom_call.1} parent=1 // pred_check_branch
      %32 = sbr.rel (0) target = $region13
    $region12: #{tpu_custom_call.1} parent=1 // pred_region
      %s34 = ssub.s32 128, 128
      %35 = vsyncadd [#allocation6], %s34
      %s37 = sshll.u32 [#allocation7], 4
      %s38 = int_to_ptr.vmem [resolvable:$true] %s37
      %40 = dma.hbm_to_vmem [thread:$0]  %s2, 128, %s38, [#allocation6]
    $region13: #{tpu_custom_call.1} parent=1 // pred_fallthru
      _
    // Predicated region
    $region14: #{tpu_custom_call.1} parent=1 // pred_check
      _
    $region15: #{tpu_custom_call.1} parent=1 // pred_check_branch
      %42 = sbr.rel (0) target = $region17
    $region16: #{tpu_custom_call.1} parent=1 // pred_region
      %43 = dma.done [#allocation3], 16
    $region17: #{tpu_custom_call.1} parent=1 // pred_fallthru
      _
    // Predicated region
    $region18: #{tpu_custom_call.1} parent=1 // pred_check
      _
    $region19: #{tpu_custom_call.1} parent=1 // pred_check_branch
      %45 = sbr.rel (0) target = $region21
    $region20: #{tpu_custom_call.1} parent=1 // pred_region
      %46 = dma.done [#allocation6], 128
    $region21: #{tpu_custom_call.1} parent=1 // pred_fallthru
      _
    // Predicated region
    $region22: #{tpu_custom_call.1} parent=1 // pred_check
      _
    $region23: #{tpu_custom_call.1} parent=1 // pred_check_branch
      %48 = sbr.rel (0) target = $region25
    $region24: #{tpu_custom_call.1} parent=1 // pred_region
      %49 = dma.done [#allocation6], 128
    $region25: #{tpu_custom_call.1} parent=1 // pred_fallthru
      _
    %v50 = vld [vmem:[#allocation2] sm:$0x1]
    %v51 = vld [vmem:[#allocation5] sm:$0xff]
    %v52 = vld [vmem:[#allocation7] sm:$0xff]
    %v53 = vlaneseq
    %v54 = vshrl.u32 %v53, 7
    %v55 = vlaneseq
    %v56 = vshrl.u32 %v55, 7
    %v57 = vsub.s32 0, %v56
    %v58 = vrot.slane %v50, %v57
    %vm59 = vcmp.eq.s32.totalorder %v58, %v54
    %v60 = vsel %vm59, 1, 0
    %v61 = vcvt.s32.f32 %v60
    %vm62 = vcmp.ne.f32.partialorder %v51, %v51
    %vm63 = vmxor %vm62, 1
    %v64 = vsel %vm63, 1, 0
    %v65 = vcvt.s32.f32 %v64
    %v66 = vsub.f32 %v51, %v52
    %v67 = vsel %vm63, %v66, 0.0
    %v68 = vand.u32 2147483647, %v67
    %v69 = vmul.f32 %v67, %v67
    %v70 = vlaneseq
    %v71 = vand.u32 %v70, 127
    %vm72 = vcmask 64512
    %v74 = vsel %vm72, %v61, 0
    %76 = vmatprep.subr.mxu0 0.0
    %77 = vmatpush1.msra.mxu0 %v69
    %78 = vmatprep.subr.mxu0 0.0
    %79 = vmatpush1.msra.mxu0 0.0
    %80 = vmatprep.subr.mxu0 0.0
    %81 = vmatpush1.msra.mxu0 0.0
    %82 = vmatprep.subr.mxu0 0.0
    %83 = vmatpush1.msra.mxu0 0.0
    %84 = vmatprep.subr.mxu0 0.0
    %85 = vmatpush1.msra.mxu0 0.0
    %86 = vmatprep.subr.mxu0 0.0
    %87 = vmatpush1.msra.mxu0 0.0
    %88 = vmatprep.subr.mxu0 0.0
    %89 = vmatpush1.msra.mxu0 0.0
    %90 = vmatprep.subr.mxu0 0.0
    %91 = vmatpush1.msra.mxu0 0.0
    %92 = vmatprep.subr.mxu0 0.0
    %93 = vmatpush1.msra.mxu0 0.0
    %94 = vmatprep.subr.mxu0 0.0
    %95 = vmatpush1.msra.mxu0 0.0
    %96 = vmatprep.subr.mxu0 0.0
    %97 = vmatpush1.msra.mxu0 0.0
    %98 = vmatprep.subr.mxu0 0.0
    %99 = vmatpush1.msra.mxu0 0.0
    %100 = vmatprep.subr.mxu0 0.0
    %101 = vmatpush1.msra.mxu0 0.0
    %102 = vmatprep.subr.mxu0 0.0
    %103 = vmatpush1.msra.mxu0 0.0
    %104 = vmatprep.subr.mxu0 0.0
    %105 = vmatpush1.msra.mxu0 0.0
    %106 = vmatprep.subr.mxu0 0.0
    %107 = vmatpush1.msra.mxu0 0.0
    %108 = vmatprep.subr.mxu0 0.0
    %109 = vmatpush1.msra.mxu0 0.0
    %110 = vmatprep.subr.mxu0 0.0
    %111 = vmatpush1.msra.mxu0 0.0
    %112 = vmatprep.subr.mxu0 0.0
    %113 = vmatpush1.msra.mxu0 0.0
    %114 = vmatprep.subr.mxu0 0.0
    %115 = vmatpush1.msra.mxu0 0.0
    %116 = vmatprep.subr.mxu0 0.0
    %117 = vmatpush1.msra.mxu0 0.0
    %118 = vmatprep.subr.mxu0 0.0
    %119 = vmatpush1.msra.mxu0 0.0
    %120 = vmatprep.subr.mxu0 0.0
    %121 = vmatpush1.msra.mxu0 0.0
    %122 = vmatprep.subr.mxu0 0.0
    %123 = vmatpush1.msra.mxu0 0.0
    %124 = vmatprep.subr.mxu0 0.0
    %125 = vmatpush1.msra.mxu0 0.0
    %126 = vmatprep.subr.mxu0 0.0
    %127 = vmatpush1.msra.mxu0 0.0
    %128 = vmatprep.subr.mxu0 0.0
    %129 = vmatpush1.msra.mxu0 0.0
    %130 = vmatprep.subr.mxu0 0.0
    %131 = vmatpush1.msra.mxu0 0.0
    %132 = vmatprep.subr.mxu0 0.0
    %133 = vmatpush1.msra.mxu0 0.0
    %134 = vmatprep.subr.mxu0 0.0
    %135 = vmatpush1.msra.mxu0 0.0
    %136 = vmatprep.subr.mxu0 0.0
    %137 = vmatpush1.msra.mxu0 0.0
    %138 = vmatprep.subr.mxu0 0.0
    %139 = vmatpush1.msra.mxu0 0.0
    %140 = vmatprep.mubr.f32.mxu0 0.0
    %141 = vmatmul.mubr.f32.gmra.mrb[0].mxu0 %v74
    %v142 = vpop.f32.mrb[0].mxu0
    %v143 = vadd.f32 0.0, %v142
    %v144 = vpop.f32.mrb[0].mxu0
    %145 = vdwg.mxu0
    %146 = vadd.xlane.f32.xlu0 %v143
    %v147 = vpop.xlane.xlu0 %146
    %vm148 = vcmp.eq.s32.totalorder %v71, 0
    %v149 = vsel %vm148, %v147, 0.0
    %150 = vmatprep.subr.mxu0 0.0
    %151 = vmatpush1.msra.mxu0 %v68
    %152 = vmatprep.subr.mxu0 0.0
    %153 = vmatpush1.msra.mxu0 0.0
    %154 = vmatprep.subr.mxu0 0.0
    %155 = vmatpush1.msra.mxu0 0.0
    %156 = vmatprep.subr.mxu0 0.0
    %157 = vmatpush1.msra.mxu0 0.0
    %158 = vmatprep.subr.mxu0 0.0
    %159 = vmatpush1.msra.mxu0 0.0
    %160 = vmatprep.subr.mxu0 0.0
    %161 = vmatpush1.msra.mxu0 0.0
    %162 = vmatprep.subr.mxu0 0.0
    %163 = vmatpush1.msra.mxu0 0.0
    %164 = vmatprep.subr.mxu0 0.0
    %165 = vmatpush1.msra.mxu0 0.0
    %166 = vmatprep.subr.mxu0 0.0
    %167 = vmatpush1.msra.mxu0 0.0
    %168 = vmatprep.subr.mxu0 0.0
    %169 = vmatpush1.msra.mxu0 0.0
    %170 = vmatprep.subr.mxu0 0.0
    %171 = vmatpush1.msra.mxu0 0.0
    %172 = vmatprep.subr.mxu0 0.0
    %173 = vmatpush1.msra.mxu0 0.0
    %174 = vmatprep.subr.mxu0 0.0
    %175 = vmatpush1.msra.mxu0 0.0
    %176 = vmatprep.subr.mxu0 0.0
    %177 = vmatpush1.msra.mxu0 0.0
    %178 = vmatprep.subr.mxu0 0.0
    %179 = vmatpush1.msra.mxu0 0.0
    %180 = vmatprep.subr.mxu0 0.0
    %181 = vmatpush1.msra.mxu0 0.0
    %182 = vmatprep.subr.mxu0 0.0
    %183 = vmatpush1.msra.mxu0 0.0
    %184 = vmatprep.subr.mxu0 0.0
    %185 = vmatpush1.msra.mxu0 0.0
    %186 = vmatprep.subr.mxu0 0.0
    %187 = vmatpush1.msra.mxu0 0.0
    %188 = vmatprep.subr.mxu0 0.0
    %189 = vmatpush1.msra.mxu0 0.0
    %190 = vmatprep.subr.mxu0 0.0
    %191 = vmatpush1.msra.mxu0 0.0
    %192 = vmatprep.subr.mxu0 0.0
    %193 = vmatpush1.msra.mxu0 0.0
    %194 = vmatprep.subr.mxu0 0.0
    %195 = vmatpush1.msra.mxu0 0.0
    %196 = vmatprep.subr.mxu0 0.0
    %197 = vmatpush1.msra.mxu0 0.0
    %198 = vmatprep.subr.mxu0 0.0
    %199 = vmatpush1.msra.mxu0 0.0
    %200 = vmatprep.subr.mxu0 0.0
    %201 = vmatpush1.msra.mxu0 0.0
    %202 = vmatprep.subr.mxu0 0.0
    %203 = vmatpush1.msra.mxu0 0.0
    %204 = vmatprep.subr.mxu0 0.0
    %205 = vmatpush1.msra.mxu0 0.0
    %206 = vmatprep.subr.mxu0 0.0
    %207 = vmatpush1.msra.mxu0 0.0
    %208 = vmatprep.subr.mxu0 0.0
    %209 = vmatpush1.msra.mxu0 0.0
    %210 = vmatprep.subr.mxu0 0.0
    %211 = vmatpush1.msra.mxu0 0.0
    %212 = vmatprep.subr.mxu0 0.0
    %213 = vmatpush1.msra.mxu0 0.0
    %214 = vmatprep.mubr.f32.mxu0 0.0
    %215 = vmatmul.mubr.f32.gmra.mrb[0].mxu0 %v74
    %v216 = vpop.f32.mrb[0].mxu0
    %v217 = vadd.f32 0.0, %v216
    %v218 = vpop.f32.mrb[0].mxu0
    %219 = vdwg.mxu0
    %220 = vadd.xlane.f32.xlu0 %v217
    %v221 = vpop.xlane.xlu0 %220
    %vm222 = vcmp.eq.s32.totalorder %v71, 1
    %v223 = vsel %vm222, %v221, %v149
    %224 = vmatprep.subr.mxu0 0.0
    %225 = vmatpush1.msra.mxu0 %v65
    %226 = vmatprep.subr.mxu0 0.0
    %227 = vmatpush1.msra.mxu0 0.0
    %228 = vmatprep.subr.mxu0 0.0
    %229 = vmatpush1.msra.mxu0 0.0
    %230 = vmatprep.subr.mxu0 0.0
    %231 = vmatpush1.msra.mxu0 0.0
    %232 = vmatprep.subr.mxu0 0.0
    %233 = vmatpush1.msra.mxu0 0.0
    %234 = vmatprep.subr.mxu0 0.0
    %235 = vmatpush1.msra.mxu0 0.0
    %236 = vmatprep.subr.mxu0 0.0
    %237 = vmatpush1.msra.mxu0 0.0
    %238 = vmatprep.subr.mxu0 0.0
    %239 = vmatpush1.msra.mxu0 0.0
    %240 = vmatprep.subr.mxu0 0.0
    %241 = vmatpush1.msra.mxu0 0.0
    %242 = vmatprep.subr.mxu0 0.0
    %243 = vmatpush1.msra.mxu0 0.0
    %244 = vmatprep.subr.mxu0 0.0
    %245 = vmatpush1.msra.mxu0 0.0
    %246 = vmatprep.subr.mxu0 0.0
    %247 = vmatpush1.msra.mxu0 0.0
    %248 = vmatprep.subr.mxu0 0.0
    %249 = vmatpush1.msra.mxu0 0.0
    %250 = vmatprep.subr.mxu0 0.0
    %251 = vmatpush1.msra.mxu0 0.0
    %252 = vmatprep.subr.mxu0 0.0
    %253 = vmatpush1.msra.mxu0 0.0
    %254 = vmatprep.subr.mxu0 0.0
    %255 = vmatpush1.msra.mxu0 0.0
    %256 = vmatprep.subr.mxu0 0.0
    %257 = vmatpush1.msra.mxu0 0.0
    %258 = vmatprep.subr.mxu0 0.0
    %259 = vmatpush1.msra.mxu0 0.0
    %260 = vmatprep.subr.mxu0 0.0
    %261 = vmatpush1.msra.mxu0 0.0
    %262 = vmatprep.subr.mxu0 0.0
    %263 = vmatpush1.msra.mxu0 0.0
    %264 = vmatprep.subr.mxu0 0.0
    %265 = vmatpush1.msra.mxu0 0.0
    %266 = vmatprep.subr.mxu0 0.0
    %267 = vmatpush1.msra.mxu0 0.0
    %268 = vmatprep.subr.mxu0 0.0
    %269 = vmatpush1.msra.mxu0 0.0
    %270 = vmatprep.subr.mxu0 0.0
    %271 = vmatpush1.msra.mxu0 0.0
    %272 = vmatprep.subr.mxu0 0.0
    %273 = vmatpush1.msra.mxu0 0.0
    %274 = vmatprep.subr.mxu0 0.0
    %275 = vmatpush1.msra.mxu0 0.0
    %276 = vmatprep.subr.mxu0 0.0
    %277 = vmatpush1.msra.mxu0 0.0
    %278 = vmatprep.subr.mxu0 0.0
    %279 = vmatpush1.msra.mxu0 0.0
    %280 = vmatprep.subr.mxu0 0.0
    %281 = vmatpush1.msra.mxu0 0.0
    %282 = vmatprep.subr.mxu0 0.0
    %283 = vmatpush1.msra.mxu0 0.0
    %284 = vmatprep.subr.mxu0 0.0
    %285 = vmatpush1.msra.mxu0 0.0
    %286 = vmatprep.subr.mxu0 0.0
    %287 = vmatpush1.msra.mxu0 0.0
    %288 = vmatprep.mubr.f32.mxu0 0.0
    %289 = vmatmul.mubr.f32.gmra.mrb[0].mxu0 %v74
    %v290 = vpop.f32.mrb[0].mxu0
    %v291 = vadd.f32 0.0, %v290
    %v292 = vpop.f32.mrb[0].mxu0
    %293 = vdwg.mxu0
    %294 = vadd.xlane.f32.xlu0 %v291
    %v295 = vpop.xlane.xlu0 %294
    %vm296 = vcmp.eq.s32.totalorder %v71, 2
    %v297 = vsel %vm296, %v295, %v223
    %298 = vst [vmem:[#allocation8] sm:$0xff] %v297
    // Predicated region
    $region26: #{tpu_custom_call.1} parent=1 // pred_check
      _
    $region27: #{tpu_custom_call.1} parent=1 // pred_check_branch
      %300 = sbr.rel (0) target = $region29
    $region28: #{tpu_custom_call.1} parent=1 // pred_region
      %s302 = ssub.s32 128, 128
      %303 = vsyncadd [#allocation4], %s302
      %s305 = sshll.u32 [#allocation8], 4
      %s306 = int_to_ptr.vmem [resolvable:$true] %s305
      %308 = dma.vmem_to_hbm [thread:$0]  %s306, 128, %s3, [#allocation4]
    $region29: #{tpu_custom_call.1} parent=1 // pred_fallthru
      _
    // Predicated region
    $region30: #{tpu_custom_call.1} parent=1 // pred_check
      _
    $region31: #{tpu_custom_call.1} parent=1 // pred_check_branch
      %310 = sbr.rel (0) target = $region33
    $region32: #{tpu_custom_call.1} parent=1 // pred_region
      %311 = dma.done [#allocation4], 128
    $region33: #{tpu_custom_call.1} parent=1 // pred_fallthru
      _
    %312 = vsyncpa [#allocation3], 1
    %313 = vsyncpa [#allocation6], 1
    %314 = vsyncpa [#allocation4], 1

</llo_original>
